<compile_context>
chip_gen: v7x
topology: tpu7x:2x2x1
jax: 0.10.0
libtpu: 0.0.40
codegen_flags: <defaults>
</compile_context>

<pallas_src>
import math

import jax
import jax.numpy as jnp
from jax.experimental import pallas as pl
from jax.experimental.pallas import tpu as pltpu


EMB_DIM = 32            # emb_dim of the module
DEFAULT_TILE_N = 8192   # rows (lanes) per grid step; ~3 MiB live VMEM per tile


def _round_up(x, m):
    return ((x + m - 1) // m) * m


def _mlp_kernel(x_ref,
                w1_ref, b1_ref,
                w2_ref, b2_ref,
                w3_ref, b3_ref,
                w4_ref, b4_ref,
                w5_ref, b5_ref,
                o_ref):
    # Transposed ("features x rows") layout: rows live on the 128-lane axis.
    # x_ref: (1, T); wK: (out, in); bK: (out, 1); o_ref: (E, T).
    x = x_ref[...].astype(jnp.float32)                                    # (1, T)

    # Layer 1: contracting dim is 1 -> pure broadcast multiply on the VPU.
    h = jnp.maximum(w1_ref[...] * x + b1_ref[...], 0.0)                   # (E/2, T)

    # Layers 2-4: (out,in) @ (in,T) on the MXU, bias broadcast over lanes, ReLU.
    # (Casting h to bf16 before the dots is a minor extra win on v6e/v7x; kept
    #  f32 because the kernel is store/DMA-bound and f32 keeps tight tolerances.)
    h = jnp.maximum(
        jnp.dot(w2_ref[...], h, preferred_element_type=jnp.float32) + b2_ref[...], 0.0)   # (E, T)
    h = jnp.maximum(
        jnp.dot(w3_ref[...], h, preferred_element_type=jnp.float32) + b3_ref[...], 0.0)   # (2E, T)
    h = jnp.maximum(
        jnp.dot(w4_ref[...], h, preferred_element_type=jnp.float32) + b4_ref[...], 0.0)   # (E, T)

    # Layer 5: final linear, no activation.
    h = jnp.dot(w5_ref[...], h, preferred_element_type=jnp.float32) + b5_ref[...]         # (E, T)

    o_ref[...] = h.astype(o_ref.dtype)


def init_params(key, emb_dim=EMB_DIM, dtype=jnp.float32):
    """Deterministic synthetic params in (out, in) weight / (out, 1) bias layout."""
    sizes = [(1, emb_dim // 2),
             (emb_dim // 2, emb_dim),
             (emb_dim, 2 * emb_dim),
             (2 * emb_dim, emb_dim),
             (emb_dim, emb_dim)]
    params = []
    for i, (fan_in, fan_out) in enumerate(sizes):
        kw, kb = jax.random.split(jax.random.fold_in(key, i))
        bound = 1.0 / math.sqrt(fan_in)  # matches torch.nn.Linear default init range
        w = jax.random.uniform(kw, (fan_out, fan_in), dtype, -bound, bound)
        b = jax.random.uniform(kb, (fan_out, 1), dtype, -bound, bound)
        params.append((w, b))
    return params


def sensor_parameter_encoding_gsd(x, params, *, max_tile_n=DEFAULT_TILE_N):
    """x: (..., 1) -> (..., EMB_DIM)."""
    lead = x.shape[:-1]
    assert x.shape[-1] == 1
    n = math.prod(lead) if lead else 1

    # NOTE(call-site policy): for tiny N (< ~1K rows) letting XLA fuse the MLP
    # is cheaper than a kernel launch; kept on the Pallas path here so the
    # kernel is exercised end-to-end.

    # Rows live on the lane axis -> tile must be a multiple of 128.
    tile_n = min(max_tile_n, _round_up(n, 128))
    n_pad = _round_up(n, tile_n)

    x_t = x.reshape(n, 1).T                                    # (1, n)
    if n_pad != n:
        x_t = jnp.pad(x_t, ((0, 0), (0, n_pad - n)))           # zero-pad tail rows

    flat_params = []
    for w, b in params:
        flat_params += [w, b]

    grid = (n_pad // tile_n,)

    # Weights/biases: whole-array blocks, constant block index -> stay resident
    # in VMEM across grid steps (no per-step re-DMA).
    param_specs = [pl.BlockSpec(p.shape, lambda i: (0, 0)) for p in flat_params]

    out_t = pl.pallas_call(
        _mlp_kernel,
        out_shape=jax.ShapeDtypeStruct((EMB_DIM, n_pad), x.dtype),
        grid=grid,
        in_specs=[pl.BlockSpec((1, tile_n), lambda i: (0, i))] + param_specs,
        out_specs=pl.BlockSpec((EMB_DIM, tile_n), lambda i: (0, i)),
        compiler_params=pltpu.CompilerParams(
            dimension_semantics=("parallel",)),   # shards tiles across TCs on v7x
    )(x_t, *flat_params)

    out = out_t[:, :n].T                                       # (n, EMB_DIM)
    return out.reshape(*lead, EMB_DIM)


def _reference(x, params):
    """Pure-JAX reference (row layout) for sanity checking."""
    h = x
    for i, (w, b) in enumerate(params):
        h = h @ w.T + b.T
        if i < len(params) - 1:
            h = jnp.maximum(h, 0.0)
    return h


if __name__ == "__main__":
    key = jax.random.PRNGKey(0)
    k_p, k_x1, k_x2 = jax.random.split(key, 3)

    params = init_params(k_p)

    # Small case matching the module usage: batch=2, channels=4, one GSD scalar
    # per channel -> (2, 4, 1).
    x = jax.random.uniform(k_x1, (2, 4, 1), jnp.float32, 0.1, 30.0)
    y = jax.block_until_ready(sensor_parameter_encoding_gsd(x, params))
    y_ref = _reference(x.reshape(-1, 1), params).reshape(2, 4, EMB_DIM)
    assert y.shape == (2, 4, EMB_DIM)
    assert jnp.allclose(y, y_ref, atol=1e-4, rtol=1e-5)

    # Slightly larger ragged case: exercises multi-tile grid + tail padding.
    x2 = jax.random.uniform(k_x2, (3, 500, 1), jnp.float32, 0.1, 30.0)
    y2 = jax.block_until_ready(
        sensor_parameter_encoding_gsd(x2, params, max_tile_n=256))
    y2_ref = _reference(x2.reshape(-1, 1), params).reshape(3, 500, EMB_DIM)
    assert y2.shape == (3, 500, EMB_DIM)
    assert jnp.allclose(y2, y2_ref, atol=1e-4, rtol=1e-5)

    print("KERNEL_OK")
</pallas_src>

<mosaic_0001>
module attributes {stable_mosaic.version = 11 : i64} {
  func.func @_mlp_kernel(%arg0: i32, %arg1: memref<1x128xf32, #tpu.memory_space<vmem>>, %arg2: memref<16x1xf32, #tpu.memory_space<vmem>>, %arg3: memref<16x1xf32, #tpu.memory_space<vmem>>, %arg4: memref<32x16xf32, #tpu.memory_space<vmem>>, %arg5: memref<32x1xf32, #tpu.memory_space<vmem>>, %arg6: memref<64x32xf32, #tpu.memory_space<vmem>>, %arg7: memref<64x1xf32, #tpu.memory_space<vmem>>, %arg8: memref<32x64xf32, #tpu.memory_space<vmem>>, %arg9: memref<32x1xf32, #tpu.memory_space<vmem>>, %arg10: memref<32x32xf32, #tpu.memory_space<vmem>>, %arg11: memref<32x1xf32, #tpu.memory_space<vmem>>, %arg12: memref<32x128xf32, #tpu.memory_space<vmem>>) attributes {dimension_semantics = [#tpu.dimension_semantics<parallel>], iteration_bounds = array<i64: 1>, scalar_prefetch = 0 : i64, scratch_operands = 0 : i64, tpu.core_type = #tpu.core_type<tc>, window_params = [{transform_indices = @transform_0, window_bounds = array<i64: 1, 128>}, {pipeline_mode = #tpu.pipeline_mode<synchronous>, transform_indices = @transform_1, window_bounds = array<i64: 16, 1>}, {pipeline_mode = #tpu.pipeline_mode<synchronous>, transform_indices = @transform_2, window_bounds = array<i64: 16, 1>}, {pipeline_mode = #tpu.pipeline_mode<synchronous>, transform_indices = @transform_3, window_bounds = array<i64: 32, 16>}, {pipeline_mode = #tpu.pipeline_mode<synchronous>, transform_indices = @transform_4, window_bounds = array<i64: 32, 1>}, {pipeline_mode = #tpu.pipeline_mode<synchronous>, transform_indices = @transform_5, window_bounds = array<i64: 64, 32>}, {pipeline_mode = #tpu.pipeline_mode<synchronous>, transform_indices = @transform_6, window_bounds = array<i64: 64, 1>}, {pipeline_mode = #tpu.pipeline_mode<synchronous>, transform_indices = @transform_7, window_bounds = array<i64: 32, 64>}, {pipeline_mode = #tpu.pipeline_mode<synchronous>, transform_indices = @transform_8, window_bounds = array<i64: 32, 1>}, {pipeline_mode = #tpu.pipeline_mode<synchronous>, transform_indices = @transform_9, window_bounds = array<i64: 32, 32>}, {pipeline_mode = #tpu.pipeline_mode<synchronous>, transform_indices = @transform_10, window_bounds = array<i64: 32, 1>}, {transform_indices = @transform_11, window_bounds = array<i64: 32, 128>}]} {
    %c0 = arith.constant 0 : index
    %c0_0 = arith.constant 0 : index
    %0 = vector.load %arg1[%c0, %c0_0] : memref<1x128xf32, #tpu.memory_space<vmem>>, vector<1x128xf32>
    %c0_1 = arith.constant 0 : index
    %c0_2 = arith.constant 0 : index
    %1 = vector.load %arg2[%c0_1, %c0_2] : memref<16x1xf32, #tpu.memory_space<vmem>>, vector<16x1xf32>
    %2 = vector.broadcast %1 : vector<16x1xf32> to vector<16x128xf32>
    %3 = vector.broadcast %0 : vector<1x128xf32> to vector<16x128xf32>
    %4 = arith.mulf %2, %3 : vector<16x128xf32>
    %c0_3 = arith.constant 0 : index
    %c0_4 = arith.constant 0 : index
    %5 = vector.load %arg3[%c0_3, %c0_4] : memref<16x1xf32, #tpu.memory_space<vmem>>, vector<16x1xf32>
    %6 = vector.broadcast %5 : vector<16x1xf32> to vector<16x128xf32>
    %7 = arith.addf %4, %6 : vector<16x128xf32>
    %cst = arith.constant 0.000000e+00 : f32
    %8 = vector.broadcast %cst : f32 to vector<16x128xf32>
    %9 = arith.maximumf %7, %8 : vector<16x128xf32>
    %c0_5 = arith.constant 0 : index
    %c0_6 = arith.constant 0 : index
    %10 = vector.load %arg4[%c0_5, %c0_6] : memref<32x16xf32, #tpu.memory_space<vmem>>, vector<32x16xf32>
    %cst_7 = arith.constant dense<0.000000e+00> : vector<32x128xf32>
    %11 = tpu.matmul %10, %9, %cst_7 {dimension_numbers = #tpu.dot_dimension_numbers<[1], [0], [0], [1], [0, 0, 1, 1], [], []>} : vector<32x16xf32>, vector<16x128xf32>, vector<32x128xf32> -> vector<32x128xf32>
    %c0_8 = arith.constant 0 : index
    %c0_9 = arith.constant 0 : index
    %12 = vector.load %arg5[%c0_8, %c0_9] : memref<32x1xf32, #tpu.memory_space<vmem>>, vector<32x1xf32>
    %13 = vector.broadcast %12 : vector<32x1xf32> to vector<32x128xf32>
    %14 = arith.addf %11, %13 : vector<32x128xf32>
    %cst_10 = arith.constant 0.000000e+00 : f32
    %15 = vector.broadcast %cst_10 : f32 to vector<32x128xf32>
    %16 = arith.maximumf %14, %15 : vector<32x128xf32>
    %c0_11 = arith.constant 0 : index
    %c0_12 = arith.constant 0 : index
    %17 = vector.load %arg6[%c0_11, %c0_12] : memref<64x32xf32, #tpu.memory_space<vmem>>, vector<64x32xf32>
    %cst_13 = arith.constant dense<0.000000e+00> : vector<64x128xf32>
    %18 = tpu.matmul %17, %16, %cst_13 {dimension_numbers = #tpu.dot_dimension_numbers<[1], [0], [0], [1], [0, 0, 1, 1], [], []>} : vector<64x32xf32>, vector<32x128xf32>, vector<64x128xf32> -> vector<64x128xf32>
    %c0_14 = arith.constant 0 : index
    %c0_15 = arith.constant 0 : index
    %19 = vector.load %arg7[%c0_14, %c0_15] : memref<64x1xf32, #tpu.memory_space<vmem>>, vector<64x1xf32>
    %20 = vector.broadcast %19 : vector<64x1xf32> to vector<64x128xf32>
    %21 = arith.addf %18, %20 : vector<64x128xf32>
    %cst_16 = arith.constant 0.000000e+00 : f32
    %22 = vector.broadcast %cst_16 : f32 to vector<64x128xf32>
    %23 = arith.maximumf %21, %22 : vector<64x128xf32>
    %c0_17 = arith.constant 0 : index
    %c0_18 = arith.constant 0 : index
    %24 = vector.load %arg8[%c0_17, %c0_18] : memref<32x64xf32, #tpu.memory_space<vmem>>, vector<32x64xf32>
    %cst_19 = arith.constant dense<0.000000e+00> : vector<32x128xf32>
    %25 = tpu.matmul %24, %23, %cst_19 {dimension_numbers = #tpu.dot_dimension_numbers<[1], [0], [0], [1], [0, 0, 1, 1], [], []>} : vector<32x64xf32>, vector<64x128xf32>, vector<32x128xf32> -> vector<32x128xf32>
    %c0_20 = arith.constant 0 : index
    %c0_21 = arith.constant 0 : index
    %26 = vector.load %arg9[%c0_20, %c0_21] : memref<32x1xf32, #tpu.memory_space<vmem>>, vector<32x1xf32>
    %27 = vector.broadcast %26 : vector<32x1xf32> to vector<32x128xf32>
    %28 = arith.addf %25, %27 : vector<32x128xf32>
    %cst_22 = arith.constant 0.000000e+00 : f32
    %29 = vector.broadcast %cst_22 : f32 to vector<32x128xf32>
    %30 = arith.maximumf %28, %29 : vector<32x128xf32>
    %c0_23 = arith.constant 0 : index
    %c0_24 = arith.constant 0 : index
    %31 = vector.load %arg10[%c0_23, %c0_24] : memref<32x32xf32, #tpu.memory_space<vmem>>, vector<32x32xf32>
    %cst_25 = arith.constant dense<0.000000e+00> : vector<32x128xf32>
    %32 = tpu.matmul %31, %30, %cst_25 {dimension_numbers = #tpu.dot_dimension_numbers<[1], [0], [0], [1], [0, 0, 1, 1], [], []>} : vector<32x32xf32>, vector<32x128xf32>, vector<32x128xf32> -> vector<32x128xf32>
    %c0_26 = arith.constant 0 : index
    %c0_27 = arith.constant 0 : index
    %33 = vector.load %arg11[%c0_26, %c0_27] : memref<32x1xf32, #tpu.memory_space<vmem>>, vector<32x1xf32>
    %34 = vector.broadcast %33 : vector<32x1xf32> to vector<32x128xf32>
    %35 = arith.addf %32, %34 : vector<32x128xf32>
    %c0_28 = arith.constant 0 : index
    %c0_29 = arith.constant 0 : index
    %36 = vector.load %arg12[%c0_28, %c0_29] : memref<32x128xf32, #tpu.memory_space<vmem>>, vector<32x128xf32>
    tpu.vector_store %arg12[%c0_28, %c0_29], %35 {strides = array<i32>} : memref<32x128xf32, #tpu.memory_space<vmem>>, vector<32x128xf32>,
    return
  }
  func.func @transform_0(%arg0: i32) -> (i32, i32) {
    %c0_i32 = arith.constant 0 : i32
    %c0_i32_0 = arith.constant 0 : i32
    return %c0_i32, %arg0 : i32, i32
  }
  func.func @transform_1(%arg0: i32) -> (i32, i32) {
    %c0_i32 = arith.constant 0 : i32
    %c0_i32_0 = arith.constant 0 : i32
    %c0_i32_1 = arith.constant 0 : i32
    return %c0_i32, %c0_i32_0 : i32, i32
  }
  func.func @transform_2(%arg0: i32) -> (i32, i32) {
    %c0_i32 = arith.constant 0 : i32
    %c0_i32_0 = arith.constant 0 : i32
    %c0_i32_1 = arith.constant 0 : i32
    return %c0_i32, %c0_i32_0 : i32, i32
  }
  func.func @transform_3(%arg0: i32) -> (i32, i32) {
    %c0_i32 = arith.constant 0 : i32
    %c0_i32_0 = arith.constant 0 : i32
    %c0_i32_1 = arith.constant 0 : i32
    return %c0_i32, %c0_i32_0 : i32, i32
  }
  func.func @transform_4(%arg0: i32) -> (i32, i32) {
    %c0_i32 = arith.constant 0 : i32
    %c0_i32_0 = arith.constant 0 : i32
    %c0_i32_1 = arith.constant 0 : i32
    return %c0_i32, %c0_i32_0 : i32, i32
  }
  func.func @transform_5(%arg0: i32) -> (i32, i32) {
    %c0_i32 = arith.constant 0 : i32
    %c0_i32_0 = arith.constant 0 : i32
    %c0_i32_1 = arith.constant 0 : i32
    return %c0_i32, %c0_i32_0 : i32, i32
  }
  func.func @transform_6(%arg0: i32) -> (i32, i32) {
    %c0_i32 = arith.constant 0 : i32
    %c0_i32_0 = arith.constant 0 : i32
    %c0_i32_1 = arith.constant 0 : i32
    return %c0_i32, %c0_i32_0 : i32, i32
  }
  func.func @transform_7(%arg0: i32) -> (i32, i32) {
    %c0_i32 = arith.constant 0 : i32
    %c0_i32_0 = arith.constant 0 : i32
    %c0_i32_1 = arith.constant 0 : i32
    return %c0_i32, %c0_i32_0 : i32, i32
  }
  func.func @transform_8(%arg0: i32) -> (i32, i32) {
    %c0_i32 = arith.constant 0 : i32
    %c0_i32_0 = arith.constant 0 : i32
    %c0_i32_1 = arith.constant 0 : i32
    return %c0_i32, %c0_i32_0 : i32, i32
  }
  func.func @transform_9(%arg0: i32) -> (i32, i32) {
    %c0_i32 = arith.constant 0 : i32
    %c0_i32_0 = arith.constant 0 : i32
    %c0_i32_1 = arith.constant 0 : i32
    return %c0_i32, %c0_i32_0 : i32, i32
  }
  func.func @transform_10(%arg0: i32) -> (i32, i32) {
    %c0_i32 = arith.constant 0 : i32
    %c0_i32_0 = arith.constant 0 : i32
    %c0_i32_1 = arith.constant 0 : i32
    return %c0_i32, %c0_i32_0 : i32, i32
  }
  func.func @transform_11(%arg0: i32) -> (i32, i32) {
    %c0_i32 = arith.constant 0 : i32
    %c0_i32_0 = arith.constant 0 : i32
    return %c0_i32, %arg0 : i32, i32
  }
}

</mosaic_0001>

<llo_original>
// kernel: tpu_custom_call.1
$region0: #{tpu_custom_call.1}
  #allocation0 [shape = 'u32[]', space=smem, size = 0x4, offset = 0x4, fixed_abs, tag = 'smem constant byte address 0x4 - core index']
  #allocation1 [shape = 'u32[144,128]{1,0:T(1,128)}', space=vmem, size = 0x12000, scoped, tag = 'internal scratch']
  %s0 = inlined_call_operand.vmem [shape: f32[1,128], index: 0, kind: input, shape index: {}]
  %s1 = inlined_call_operand.vmem [shape: f32[16,1], index: 1, kind: input, shape index: {}]
  %s2 = inlined_call_operand.vmem [shape: f32[16,1], index: 2, kind: input, shape index: {}]
  %s3 = inlined_call_operand.vmem [shape: f32[32,16], index: 3, kind: input, shape index: {}]
  %s4 = inlined_call_operand.vmem [shape: f32[32,1], index: 4, kind: input, shape index: {}]
  %s5 = inlined_call_operand.vmem [shape: f32[64,32], index: 5, kind: input, shape index: {}]
  %s6 = inlined_call_operand.vmem [shape: f32[64,1], index: 6, kind: input, shape index: {}]
  %s7 = inlined_call_operand.vmem [shape: f32[32,64], index: 7, kind: input, shape index: {}]
  %s8 = inlined_call_operand.vmem [shape: f32[32,1], index: 8, kind: input, shape index: {}]
  %s9 = inlined_call_operand.vmem [shape: f32[32,32], index: 9, kind: input, shape index: {}]
  %s10 = inlined_call_operand.vmem [shape: f32[32,1], index: 10, kind: input, shape index: {}]
  %s11 = inlined_call_operand.hbm [shape: f32[32,128], index: 11, kind: output, shape index: {}]
  %s12 = sld [smem:[#allocation0]]
  $region54: #{tpu_custom_call.1} parent=0
    _
  %s14 = ssub.s32 1, %s12
  %s15 = scalar_select 0, %s14, %s12
  $region1: #{tpu_custom_call.1} parent=0
    #allocation2 [shape = 'u8[16384]{0}', space=vmem, size = 0x4000, scoped, tag = 'output window, operand 0, single buffered']
    #allocation3 [shape = 's32[1]{0}', space=sflag, size = 0x4, scoped, tag = 'scoped memory for tpu_custom_call.1']
    %16 = vsyncpa [#allocation3], 0
    // Predicated region
    $region2: #{tpu_custom_call.1} parent=1 // pred_check
      _
    $region3: #{tpu_custom_call.1} parent=1 // pred_check_branch
      %18 = sbr.rel (0) target = $region5
    $region4: #{tpu_custom_call.1} parent=1 // pred_region
      _
    $region5: #{tpu_custom_call.1} parent=1 // pred_fallthru
      _
    // Predicated region
    $region6: #{tpu_custom_call.1} parent=1 // pred_check
      _
    $region7: #{tpu_custom_call.1} parent=1 // pred_check_branch
      %20 = sbr.rel (0) target = $region9
    $region8: #{tpu_custom_call.1} parent=1 // pred_region
      _
    $region9: #{tpu_custom_call.1} parent=1 // pred_fallthru
      _
    // Predicated region
    $region10: #{tpu_custom_call.1} parent=1 // pred_check
      _
    $region11: #{tpu_custom_call.1} parent=1 // pred_check_branch
      %22 = sbr.rel (0) target = $region13
    $region12: #{tpu_custom_call.1} parent=1 // pred_region
      _
    $region13: #{tpu_custom_call.1} parent=1 // pred_fallthru
      _
    // Predicated region
    $region14: #{tpu_custom_call.1} parent=1 // pred_check
      _
    $region15: #{tpu_custom_call.1} parent=1 // pred_check_branch
      %24 = sbr.rel (0) target = $region17
    $region16: #{tpu_custom_call.1} parent=1 // pred_region
      _
    $region17: #{tpu_custom_call.1} parent=1 // pred_fallthru
      _
    // Predicated region
    $region18: #{tpu_custom_call.1} parent=1 // pred_check
      _
    $region19: #{tpu_custom_call.1} parent=1 // pred_check_branch
      %26 = sbr.rel (0) target = $region21
    $region20: #{tpu_custom_call.1} parent=1 // pred_region
      _
    $region21: #{tpu_custom_call.1} parent=1 // pred_fallthru
      _
    // Predicated region
    $region22: #{tpu_custom_call.1} parent=1 // pred_check
      _
    $region23: #{tpu_custom_call.1} parent=1 // pred_check_branch
      %28 = sbr.rel (0) target = $region25
    $region24: #{tpu_custom_call.1} parent=1 // pred_region
      _
    $region25: #{tpu_custom_call.1} parent=1 // pred_fallthru
      _
    // Predicated region
    $region26: #{tpu_custom_call.1} parent=1 // pred_check
      _
    $region27: #{tpu_custom_call.1} parent=1 // pred_check_branch
      %30 = sbr.rel (0) target = $region29
    $region28: #{tpu_custom_call.1} parent=1 // pred_region
      _
    $region29: #{tpu_custom_call.1} parent=1 // pred_fallthru
      _
    // Predicated region
    $region30: #{tpu_custom_call.1} parent=1 // pred_check
      _
    $region31: #{tpu_custom_call.1} parent=1 // pred_check_branch
      %32 = sbr.rel (0) target = $region33
    $region32: #{tpu_custom_call.1} parent=1 // pred_region
      _
    $region33: #{tpu_custom_call.1} parent=1 // pred_fallthru
      _
    // Predicated region
    $region34: #{tpu_custom_call.1} parent=1 // pred_check
      _
    $region35: #{tpu_custom_call.1} parent=1 // pred_check_branch
      %34 = sbr.rel (0) target = $region37
    $region36: #{tpu_custom_call.1} parent=1 // pred_region
      _
    $region37: #{tpu_custom_call.1} parent=1 // pred_fallthru
      _
    // Predicated region
    $region38: #{tpu_custom_call.1} parent=1 // pred_check
      _
    $region39: #{tpu_custom_call.1} parent=1 // pred_check_branch
      %36 = sbr.rel (0) target = $region41
    $region40: #{tpu_custom_call.1} parent=1 // pred_region
      _
    $region41: #{tpu_custom_call.1} parent=1 // pred_fallthru
      _
    // Predicated region
    $region42: #{tpu_custom_call.1} parent=1 // pred_check
      _
    $region43: #{tpu_custom_call.1} parent=1 // pred_check_branch
      %38 = sbr.rel (0) target = $region45
    $region44: #{tpu_custom_call.1} parent=1 // pred_region
      _
    $region45: #{tpu_custom_call.1} parent=1 // pred_fallthru
      _
    %v39 = vld [vmem:[%s0] sm:$0x1]
    %v40 = vld [vmem:[%s1] sm:$0xff]
    %v41 = vld [vmem:[%s1 + $0x8] sm:$0xff]
    %43 = vset.pattern.permute.xlu0 0
    %44 = vperm.xlu0 %43, %v40
    %v45 = vpop.permute.xlu0 %44
    %48 = vset.pattern.permute.xlu0 0
    %49 = vperm.xlu0 %48, %v41
    %v50 = vpop.permute.xlu0 %49
    %v53 = vlaneseq
    %v54 = vshrl.u32 %v53, 7
    %v55 = vsub.s32 0, %v54
    %v56 = vrot.slane %v39, %v55
    %v58 = vmul.f32 %v45, %v56
    %v59 = vmul.f32 %v50, %v56
    %v60 = vld [vmem:[%s2] sm:$0xff]
    %v61 = vld [vmem:[%s2 + $0x8] sm:$0xff]
    %63 = vset.pattern.permute.xlu0 0
    %64 = vperm.xlu0 %63, %v60
    %v65 = vpop.permute.xlu0 %64
    %68 = vset.pattern.permute.xlu0 0
    %69 = vperm.xlu0 %68, %v61
    %v70 = vpop.permute.xlu0 %69
    %v72 = vadd.f32 %v58, %v65
    %v73 = vadd.f32 %v59, %v70
    %v74 = vmax.f32 %v72, 0.0
    %v75 = vmax.f32 %v73, 0.0
    %v76 = vld [vmem:[%s3] sm:$0xff]
    %v77 = vld [vmem:[%s3 + $0x8] sm:$0xff]
    %v78 = vld [vmem:[%s3 + $0x10] sm:$0xff]
    %v79 = vld [vmem:[%s3 + $0x18] sm:$0xff]
    %v80 = vld [vmem:[%s4] sm:$0xff]
    %v81 = vld [vmem:[%s4 + $0x8] sm:$0xff]
    %v82 = vld [vmem:[%s4 + $0x10] sm:$0xff]
    %v83 = vld [vmem:[%s4 + $0x18] sm:$0xff]
    %85 = vset.pattern.permute.xlu0 0
    %86 = vperm.xlu0 %85, %v80
    %v87 = vpop.permute.xlu0 %86
    %90 = vset.pattern.permute.xlu0 0
    %91 = vperm.xlu0 %90, %v81
    %v92 = vpop.permute.xlu0 %91
    %95 = vset.pattern.permute.xlu0 0
    %96 = vperm.xlu0 %95, %v82
    %v97 = vpop.permute.xlu0 %96
    %100 = vset.pattern.permute.xlu0 0
    %101 = vperm.xlu0 %100, %v83
    %v102 = vpop.permute.xlu0 %101
    %vm104 = vcmask 130048
    %v106 = vsel %vm104, %v76, 0
    %v109 = vsel %vm104, %v77, 0
    %v112 = vsel %vm104, %v78, 0
    %v115 = vsel %vm104, %v79, 0
    %117 = vmatprep.subr.mxu0 0.0
    %118 = vmatpush1.msra.mxu0 %v74
    %119 = vmatprep.subr.mxu0 0.0
    %120 = vmatpush1.msra.mxu0 %v75
    %121 = vmatprep.subr.mxu0 0.0
    %122 = vmatpush1.msra.mxu0 0.0
    %123 = vmatprep.subr.mxu0 0.0
    %124 = vmatpush1.msra.mxu0 0.0
    %125 = vmatprep.subr.mxu0 0.0
    %126 = vmatpush1.msra.mxu0 0.0
    %127 = vmatprep.subr.mxu0 0.0
    %128 = vmatpush1.msra.mxu0 0.0
    %129 = vmatprep.subr.mxu0 0.0
    %130 = vmatpush1.msra.mxu0 0.0
    %131 = vmatprep.subr.mxu0 0.0
    %132 = vmatpush1.msra.mxu0 0.0
    %133 = vmatprep.subr.mxu0 0.0
    %134 = vmatpush1.msra.mxu0 0.0
    %135 = vmatprep.subr.mxu0 0.0
    %136 = vmatpush1.msra.mxu0 0.0
    %137 = vmatprep.subr.mxu0 0.0
    %138 = vmatpush1.msra.mxu0 0.0
    %139 = vmatprep.subr.mxu0 0.0
    %140 = vmatpush1.msra.mxu0 0.0
    %141 = vmatprep.subr.mxu0 0.0
    %142 = vmatpush1.msra.mxu0 0.0
    %143 = vmatprep.subr.mxu0 0.0
    %144 = vmatpush1.msra.mxu0 0.0
    %145 = vmatprep.subr.mxu0 0.0
    %146 = vmatpush1.msra.mxu0 0.0
    %147 = vmatprep.subr.mxu0 0.0
    %148 = vmatpush1.msra.mxu0 0.0
    %149 = vmatprep.subr.mxu0 0.0
    %150 = vmatpush1.msra.mxu0 0.0
    %151 = vmatprep.subr.mxu0 0.0
    %152 = vmatpush1.msra.mxu0 0.0
    %153 = vmatprep.subr.mxu0 0.0
    %154 = vmatpush1.msra.mxu0 0.0
    %155 = vmatprep.subr.mxu0 0.0
    %156 = vmatpush1.msra.mxu0 0.0
    %157 = vmatprep.subr.mxu0 0.0
    %158 = vmatpush1.msra.mxu0 0.0
    %159 = vmatprep.subr.mxu0 0.0
    %160 = vmatpush1.msra.mxu0 0.0
    %161 = vmatprep.subr.mxu0 0.0
    %162 = vmatpush1.msra.mxu0 0.0
    %163 = vmatprep.subr.mxu0 0.0
    %164 = vmatpush1.msra.mxu0 0.0
    %165 = vmatprep.subr.mxu0 0.0
    %166 = vmatpush1.msra.mxu0 0.0
    %167 = vmatprep.subr.mxu0 0.0
    %168 = vmatpush1.msra.mxu0 0.0
    %169 = vmatprep.subr.mxu0 0.0
    %170 = vmatpush1.msra.mxu0 0.0
    %171 = vmatprep.subr.mxu0 0.0
    %172 = vmatpush1.msra.mxu0 0.0
    %173 = vmatprep.subr.mxu0 0.0
    %174 = vmatpush1.msra.mxu0 0.0
    %175 = vmatprep.subr.mxu0 0.0
    %176 = vmatpush1.msra.mxu0 0.0
    %177 = vmatprep.subr.mxu0 0.0
    %178 = vmatpush1.msra.mxu0 0.0
    %179 = vmatprep.subr.mxu0 0.0
    %180 = vmatpush1.msra.mxu0 0.0
    %181 = vmatprep.mubr.f32.mxu0 0.0
    %182 = vmatmul.mubr.f32.gmra.mrb[0].mxu0 %v106
    %v183 = vpop.f32.mrb[0].mxu0
    %v184 = vadd.f32 %v87, %v183
    %v185 = vpop.f32.mrb[0].mxu0
    %186 = vmatprep.mubr.f32.mxu0 0.0
    %187 = vmatmul.mubr.f32.gmra.mrb[0].mxu0 %v109
    %v188 = vpop.f32.mrb[0].mxu0
    %v189 = vadd.f32 %v92, %v188
    %v190 = vpop.f32.mrb[0].mxu0
    %191 = vmatprep.mubr.f32.mxu0 0.0
    %192 = vmatmul.mubr.f32.gmra.mrb[0].mxu0 %v112
    %v193 = vpop.f32.mrb[0].mxu0
    %v194 = vadd.f32 %v97, %v193
    %v195 = vpop.f32.mrb[0].mxu0
    %196 = vmatprep.mubr.f32.mxu0 0.0
    %197 = vmatmul.mubr.f32.gmra.mrb[0].mxu0 %v115
    %v198 = vpop.f32.mrb[0].mxu0
    %v199 = vadd.f32 %v102, %v198
    %v200 = vpop.f32.mrb[0].mxu0
    %201 = vdwg.mxu0
    %v202 = vmax.f32 %v184, 0.0
    %v203 = vmax.f32 %v189, 0.0
    %v204 = vmax.f32 %v194, 0.0
    %v205 = vmax.f32 %v199, 0.0
    %v206 = vld [vmem:[%s5] sm:$0xff]
    %v207 = vld [vmem:[%s5 + $0x8] sm:$0xff]
    %v208 = vld [vmem:[%s5 + $0x10] sm:$0xff]
    %v209 = vld [vmem:[%s5 + $0x18] sm:$0xff]
    %v210 = vld [vmem:[%s5 + $0x20] sm:$0xff]
    %v211 = vld [vmem:[%s5 + $0x28] sm:$0xff]
    %v212 = vld [vmem:[%s5 + $0x30] sm:$0xff]
    %v213 = vld [vmem:[%s5 + $0x38] sm:$0xff]
    %v214 = vld [vmem:[%s6] sm:$0xff]
    %v215 = vld [vmem:[%s6 + $0x8] sm:$0xff]
    %v216 = vld [vmem:[%s6 + $0x10] sm:$0xff]
    %v217 = vld [vmem:[%s6 + $0x18] sm:$0xff]
    %v218 = vld [vmem:[%s6 + $0x20] sm:$0xff]
    %v219 = vld [vmem:[%s6 + $0x28] sm:$0xff]
    %v220 = vld [vmem:[%s6 + $0x30] sm:$0xff]
    %v221 = vld [vmem:[%s6 + $0x38] sm:$0xff]
    %223 = vset.pattern.permute.xlu0 0
    %224 = vperm.xlu0 %223, %v214
    %v225 = vpop.permute.xlu0 %224
    %228 = vset.pattern.permute.xlu0 0
    %229 = vperm.xlu0 %228, %v215
    %v230 = vpop.permute.xlu0 %229
    %233 = vset.pattern.permute.xlu0 0
    %234 = vperm.xlu0 %233, %v216
    %v235 = vpop.permute.xlu0 %234
    %238 = vset.pattern.permute.xlu0 0
    %239 = vperm.xlu0 %238, %v217
    %v240 = vpop.permute.xlu0 %239
    %243 = vset.pattern.permute.xlu0 0
    %244 = vperm.xlu0 %243, %v218
    %v245 = vpop.permute.xlu0 %244
    %248 = vset.pattern.permute.xlu0 0
    %249 = vperm.xlu0 %248, %v219
    %v250 = vpop.permute.xlu0 %249
    %253 = vset.pattern.permute.xlu0 0
    %254 = vperm.xlu0 %253, %v220
    %v255 = vpop.permute.xlu0 %254
    %258 = vset.pattern.permute.xlu0 0
    %259 = vperm.xlu0 %258, %v221
    %v260 = vpop.permute.xlu0 %259
    %vm262 = vcmask 261120
    %v264 = vsel %vm262, %v206, 0
    %v267 = vsel %vm262, %v207, 0
    %v270 = vsel %vm262, %v208, 0
    %v273 = vsel %vm262, %v209, 0
    %v276 = vsel %vm262, %v210, 0
    %v279 = vsel %vm262, %v211, 0
    %v282 = vsel %vm262, %v212, 0
    %v285 = vsel %vm262, %v213, 0
    %287 = vmatprep.subr.mxu0 0.0
    %288 = vmatpush1.msra.mxu0 %v202
    %289 = vmatprep.subr.mxu0 0.0
    %290 = vmatpush1.msra.mxu0 %v203
    %291 = vmatprep.subr.mxu0 0.0
    %292 = vmatpush1.msra.mxu0 %v204
    %293 = vmatprep.subr.mxu0 0.0
    %294 = vmatpush1.msra.mxu0 %v205
    %295 = vmatprep.subr.mxu0 0.0
    %296 = vmatpush1.msra.mxu0 0.0
    %297 = vmatprep.subr.mxu0 0.0
    %298 = vmatpush1.msra.mxu0 0.0
    %299 = vmatprep.subr.mxu0 0.0
    %300 = vmatpush1.msra.mxu0 0.0
    %301 = vmatprep.subr.mxu0 0.0
    %302 = vmatpush1.msra.mxu0 0.0
    %303 = vmatprep.subr.mxu0 0.0
    %304 = vmatpush1.msra.mxu0 0.0
    %305 = vmatprep.subr.mxu0 0.0
    %306 = vmatpush1.msra.mxu0 0.0
    %307 = vmatprep.subr.mxu0 0.0
    %308 = vmatpush1.msra.mxu0 0.0
    %309 = vmatprep.subr.mxu0 0.0
    %310 = vmatpush1.msra.mxu0 0.0
    %311 = vmatprep.subr.mxu0 0.0
    %312 = vmatpush1.msra.mxu0 0.0
    %313 = vmatprep.subr.mxu0 0.0
    %314 = vmatpush1.msra.mxu0 0.0
    %315 = vmatprep.subr.mxu0 0.0
    %316 = vmatpush1.msra.mxu0 0.0
    %317 = vmatprep.subr.mxu0 0.0
    %318 = vmatpush1.msra.mxu0 0.0
    %319 = vmatprep.subr.mxu0 0.0
    %320 = vmatpush1.msra.mxu0 0.0
    %321 = vmatprep.subr.mxu0 0.0
    %322 = vmatpush1.msra.mxu0 0.0
    %323 = vmatprep.subr.mxu0 0.0
    %324 = vmatpush1.msra.mxu0 0.0
    %325 = vmatprep.subr.mxu0 0.0
    %326 = vmatpush1.msra.mxu0 0.0
    %327 = vmatprep.subr.mxu0 0.0
    %328 = vmatpush1.msra.mxu0 0.0
    %329 = vmatprep.subr.mxu0 0.0
    %330 = vmatpush1.msra.mxu0 0.0
    %331 = vmatprep.subr.mxu0 0.0
    %332 = vmatpush1.msra.mxu0 0.0
    %333 = vmatprep.subr.mxu0 0.0
    %334 = vmatpush1.msra.mxu0 0.0
    %335 = vmatprep.subr.mxu0 0.0
    %336 = vmatpush1.msra.mxu0 0.0
    %337 = vmatprep.subr.mxu0 0.0
    %338 = vmatpush1.msra.mxu0 0.0
    %339 = vmatprep.subr.mxu0 0.0
    %340 = vmatpush1.msra.mxu0 0.0
    %341 = vmatprep.subr.mxu0 0.0
    %342 = vmatpush1.msra.mxu0 0.0
    %343 = vmatprep.subr.mxu0 0.0
    %344 = vmatpush1.msra.mxu0 0.0
    %345 = vmatprep.subr.mxu0 0.0
    %346 = vmatpush1.msra.mxu0 0.0
    %347 = vmatprep.subr.mxu0 0.0
    %348 = vmatpush1.msra.mxu0 0.0
    %349 = vmatprep.subr.mxu0 0.0
    %350 = vmatpush1.msra.mxu0 0.0
    %351 = vmatprep.mubr.f32.mxu0 0.0
    %352 = vmatmul.mubr.f32.gmra.mrb[0].mxu0 %v264
    %v353 = vpop.f32.mrb[0].mxu0
    %v354 = vadd.f32 %v225, %v353
    %v355 = vpop.f32.mrb[0].mxu0
    %356 = vmatprep.mubr.f32.mxu0 0.0
    %357 = vmatmul.mubr.f32.gmra.mrb[0].mxu0 %v267
    %v358 = vpop.f32.mrb[0].mxu0
    %v359 = vadd.f32 %v230, %v358
    %v360 = vpop.f32.mrb[0].mxu0
    %361 = vmatprep.mubr.f32.mxu0 0.0
    %362 = vmatmul.mubr.f32.gmra.mrb[0].mxu0 %v270
    %v363 = vpop.f32.mrb[0].mxu0
    %v364 = vadd.f32 %v235, %v363
    %v365 = vpop.f32.mrb[0].mxu0
    %366 = vmatprep.mubr.f32.mxu0 0.0
    %367 = vmatmul.mubr.f32.gmra.mrb[0].mxu0 %v273
    %v368 = vpop.f32.mrb[0].mxu0
    %v369 = vadd.f32 %v240, %v368
    %v370 = vpop.f32.mrb[0].mxu0
    %371 = vmatprep.mubr.f32.mxu0 0.0
    %372 = vmatmul.mubr.f32.gmra.mrb[0].mxu0 %v276
    %v373 = vpop.f32.mrb[0].mxu0
    %v374 = vadd.f32 %v245, %v373
    %v375 = vpop.f32.mrb[0].mxu0
    %376 = vmatprep.mubr.f32.mxu0 0.0
    %377 = vmatmul.mubr.f32.gmra.mrb[0].mxu0 %v279
    %v378 = vpop.f32.mrb[0].mxu0
    %v379 = vadd.f32 %v250, %v378
    %v380 = vpop.f32.mrb[0].mxu0
    %381 = vmatprep.mubr.f32.mxu0 0.0
    %382 = vmatmul.mubr.f32.gmra.mrb[0].mxu0 %v282
    %v383 = vpop.f32.mrb[0].mxu0
    %v384 = vadd.f32 %v255, %v383
    %v385 = vpop.f32.mrb[0].mxu0
    %386 = vmatprep.mubr.f32.mxu0 0.0
    %387 = vmatmul.mubr.f32.gmra.mrb[0].mxu0 %v285
    %v388 = vpop.f32.mrb[0].mxu0
    %v389 = vadd.f32 %v260, %v388
    %v390 = vpop.f32.mrb[0].mxu0
    %391 = vdwg.mxu0
    %v392 = vmax.f32 %v354, 0.0
    %v393 = vmax.f32 %v359, 0.0
    %v394 = vmax.f32 %v364, 0.0
    %v395 = vmax.f32 %v369, 0.0
    %v396 = vmax.f32 %v374, 0.0
    %v397 = vmax.f32 %v379, 0.0
    %v398 = vmax.f32 %v384, 0.0
    %v399 = vmax.f32 %v389, 0.0
    %v400 = vld [vmem:[%s7] sm:$0xff]
    %v401 = vld [vmem:[%s7 + $0x8] sm:$0xff]
    %v402 = vld [vmem:[%s7 + $0x10] sm:$0xff]
    %v403 = vld [vmem:[%s7 + $0x18] sm:$0xff]
    %v404 = vld [vmem:[%s8] sm:$0xff]
    %v405 = vld [vmem:[%s8 + $0x8] sm:$0xff]
    %v406 = vld [vmem:[%s8 + $0x10] sm:$0xff]
    %v407 = vld [vmem:[%s8 + $0x18] sm:$0xff]
    %409 = vset.pattern.permute.xlu0 0
    %410 = vperm.xlu0 %409, %v404
    %v411 = vpop.permute.xlu0 %410
    %414 = vset.pattern.permute.xlu0 0
    %415 = vperm.xlu0 %414, %v405
    %v416 = vpop.permute.xlu0 %415
    %419 = vset.pattern.permute.xlu0 0
    %420 = vperm.xlu0 %419, %v406
    %v421 = vpop.permute.xlu0 %420
    %424 = vset.pattern.permute.xlu0 0
    %425 = vperm.xlu0 %424, %v407
    %v426 = vpop.permute.xlu0 %425
    %vm428 = vcmask 523264
    %v430 = vsel %vm428, %v400, 0
    %v433 = vsel %vm428, %v401, 0
    %v436 = vsel %vm428, %v402, 0
    %v439 = vsel %vm428, %v403, 0
    %441 = vmatprep.subr.mxu0 0.0
    %442 = vmatpush1.msra.mxu0 %v392
    %443 = vmatprep.subr.mxu0 0.0
    %444 = vmatpush1.msra.mxu0 %v393
    %445 = vmatprep.subr.mxu0 0.0
    %446 = vmatpush1.msra.mxu0 %v394
    %447 = vmatprep.subr.mxu0 0.0
    %448 = vmatpush1.msra.mxu0 %v395
    %449 = vmatprep.subr.mxu0 0.0
    %450 = vmatpush1.msra.mxu0 %v396
    %451 = vmatprep.subr.mxu0 0.0
    %452 = vmatpush1.msra.mxu0 %v397
    %453 = vmatprep.subr.mxu0 0.0
    %454 = vmatpush1.msra.mxu0 %v398
    %455 = vmatprep.subr.mxu0 0.0
    %456 = vmatpush1.msra.mxu0 %v399
    %457 = vmatprep.subr.mxu0 0.0
    %458 = vmatpush1.msra.mxu0 0.0
    %459 = vmatprep.subr.mxu0 0.0
    %460 = vmatpush1.msra.mxu0 0.0
    %461 = vmatprep.subr.mxu0 0.0
    %462 = vmatpush1.msra.mxu0 0.0
    %463 = vmatprep.subr.mxu0 0.0
    %464 = vmatpush1.msra.mxu0 0.0
    %465 = vmatprep.subr.mxu0 0.0
    %466 = vmatpush1.msra.mxu0 0.0
    %467 = vmatprep.subr.mxu0 0.0
    %468 = vmatpush1.msra.mxu0 0.0
    %469 = vmatprep.subr.mxu0 0.0
    %470 = vmatpush1.msra.mxu0 0.0
    %471 = vmatprep.subr.mxu0 0.0
    %472 = vmatpush1.msra.mxu0 0.0
    %473 = vmatprep.subr.mxu0 0.0
    %474 = vmatpush1.msra.mxu0 0.0
    %475 = vmatprep.subr.mxu0 0.0
    %476 = vmatpush1.msra.mxu0 0.0
    %477 = vmatprep.subr.mxu0 0.0
    %478 = vmatpush1.msra.mxu0 0.0
    %479 = vmatprep.subr.mxu0 0.0
    %480 = vmatpush1.msra.mxu0 0.0
    %481 = vmatprep.subr.mxu0 0.0
    %482 = vmatpush1.msra.mxu0 0.0
    %483 = vmatprep.subr.mxu0 0.0
    %484 = vmatpush1.msra.mxu0 0.0
    %485 = vmatprep.subr.mxu0 0.0
    %486 = vmatpush1.msra.mxu0 0.0
    %487 = vmatprep.subr.mxu0 0.0
    %488 = vmatpush1.msra.mxu0 0.0
    %489 = vmatprep.subr.mxu0 0.0
    %490 = vmatpush1.msra.mxu0 0.0
    %491 = vmatprep.subr.mxu0 0.0
    %492 = vmatpush1.msra.mxu0 0.0
    %493 = vmatprep.subr.mxu0 0.0
    %494 = vmatpush1.msra.mxu0 0.0
    %495 = vmatprep.subr.mxu0 0.0
    %496 = vmatpush1.msra.mxu0 0.0
    %497 = vmatprep.subr.mxu0 0.0
    %498 = vmatpush1.msra.mxu0 0.0
    %499 = vmatprep.subr.mxu0 0.0
    %500 = vmatpush1.msra.mxu0 0.0
    %501 = vmatprep.subr.mxu0 0.0
    %502 = vmatpush1.msra.mxu0 0.0
    %503 = vmatprep.subr.mxu0 0.0
    %504 = vmatpush1.msra.mxu0 0.0
    %505 = vmatprep.mubr.f32.mxu0 0.0
    %506 = vmatmul.mubr.f32.gmra.mrb[0].mxu0 %v430
    %v507 = vpop.f32.mrb[0].mxu0
    %v508 = vadd.f32 %v411, %v507
    %v509 = vpop.f32.mrb[0].mxu0
    %510 = vmatprep.mubr.f32.mxu0 0.0
    %511 = vmatmul.mubr.f32.gmra.mrb[0].mxu0 %v433
    %v512 = vpop.f32.mrb[0].mxu0
    %v513 = vadd.f32 %v416, %v512
    %v514 = vpop.f32.mrb[0].mxu0
    %515 = vmatprep.mubr.f32.mxu0 0.0
    %516 = vmatmul.mubr.f32.gmra.mrb[0].mxu0 %v436
    %v517 = vpop.f32.mrb[0].mxu0
    %v518 = vadd.f32 %v421, %v517
    %v519 = vpop.f32.mrb[0].mxu0
    %520 = vmatprep.mubr.f32.mxu0 0.0
    %521 = vmatmul.mubr.f32.gmra.mrb[0].mxu0 %v439
    %v522 = vpop.f32.mrb[0].mxu0
    %v523 = vadd.f32 %v426, %v522
    %v524 = vpop.f32.mrb[0].mxu0
    %525 = vdwg.mxu0
    %v526 = vmax.f32 %v508, 0.0
    %v527 = vmax.f32 %v513, 0.0
    %v528 = vmax.f32 %v518, 0.0
    %v529 = vmax.f32 %v523, 0.0
    %v530 = vld [vmem:[%s9] sm:$0xff]
    %v531 = vld [vmem:[%s9 + $0x8] sm:$0xff]
    %v532 = vld [vmem:[%s9 + $0x10] sm:$0xff]
    %v533 = vld [vmem:[%s9 + $0x18] sm:$0xff]
    %v534 = vld [vmem:[%s10] sm:$0xff]
    %v535 = vld [vmem:[%s10 + $0x8] sm:$0xff]
    %v536 = vld [vmem:[%s10 + $0x10] sm:$0xff]
    %v537 = vld [vmem:[%s10 + $0x18] sm:$0xff]
    %539 = vset.pattern.permute.xlu0 0
    %540 = vperm.xlu0 %539, %v534
    %v541 = vpop.permute.xlu0 %540
    %544 = vset.pattern.permute.xlu0 0
    %545 = vperm.xlu0 %544, %v535
    %v546 = vpop.permute.xlu0 %545
    %549 = vset.pattern.permute.xlu0 0
    %550 = vperm.xlu0 %549, %v536
    %v551 = vpop.permute.xlu0 %550
    %554 = vset.pattern.permute.xlu0 0
    %555 = vperm.xlu0 %554, %v537
    %v556 = vpop.permute.xlu0 %555
    %v559 = vsel %vm262, %v530, 0
    %v562 = vsel %vm262, %v531, 0
    %v565 = vsel %vm262, %v532, 0
    %v568 = vsel %vm262, %v533, 0
    %570 = vmatprep.subr.mxu0 0.0
    %571 = vmatpush1.msra.mxu0 %v526
    %572 = vmatprep.subr.mxu0 0.0
    %573 = vmatpush1.msra.mxu0 %v527
    %574 = vmatprep.subr.mxu0 0.0
    %575 = vmatpush1.msra.mxu0 %v528
    %576 = vmatprep.subr.mxu0 0.0
    %577 = vmatpush1.msra.mxu0 %v529
    %578 = vmatprep.subr.mxu0 0.0
    %579 = vmatpush1.msra.mxu0 0.0
    %580 = vmatprep.subr.mxu0 0.0
    %581 = vmatpush1.msra.mxu0 0.0
    %582 = vmatprep.subr.mxu0 0.0
    %583 = vmatpush1.msra.mxu0 0.0
    %584 = vmatprep.subr.mxu0 0.0
    %585 = vmatpush1.msra.mxu0 0.0
    %586 = vmatprep.subr.mxu0 0.0
    %587 = vmatpush1.msra.mxu0 0.0
    %588 = vmatprep.subr.mxu0 0.0
    %589 = vmatpush1.msra.mxu0 0.0
    %590 = vmatprep.subr.mxu0 0.0
    %591 = vmatpush1.msra.mxu0 0.0
    %592 = vmatprep.subr.mxu0 0.0
    %593 = vmatpush1.msra.mxu0 0.0
    %594 = vmatprep.subr.mxu0 0.0
    %595 = vmatpush1.msra.mxu0 0.0
    %596 = vmatprep.subr.mxu0 0.0
    %597 = vmatpush1.msra.mxu0 0.0
    %598 = vmatprep.subr.mxu0 0.0
    %599 = vmatpush1.msra.mxu0 0.0
    %600 = vmatprep.subr.mxu0 0.0
    %601 = vmatpush1.msra.mxu0 0.0
    %602 = vmatprep.subr.mxu0 0.0
    %603 = vmatpush1.msra.mxu0 0.0
    %604 = vmatprep.subr.mxu0 0.0
    %605 = vmatpush1.msra.mxu0 0.0
    %606 = vmatprep.subr.mxu0 0.0
    %607 = vmatpush1.msra.mxu0 0.0
    %608 = vmatprep.subr.mxu0 0.0
    %609 = vmatpush1.msra.mxu0 0.0
    %610 = vmatprep.subr.mxu0 0.0
    %611 = vmatpush1.msra.mxu0 0.0
    %612 = vmatprep.subr.mxu0 0.0
    %613 = vmatpush1.msra.mxu0 0.0
    %614 = vmatprep.subr.mxu0 0.0
    %615 = vmatpush1.msra.mxu0 0.0
    %616 = vmatprep.subr.mxu0 0.0
    %617 = vmatpush1.msra.mxu0 0.0
    %618 = vmatprep.subr.mxu0 0.0
    %619 = vmatpush1.msra.mxu0 0.0
    %620 = vmatprep.subr.mxu0 0.0
    %621 = vmatpush1.msra.mxu0 0.0
    %622 = vmatprep.subr.mxu0 0.0
    %623 = vmatpush1.msra.mxu0 0.0
    %624 = vmatprep.subr.mxu0 0.0
    %625 = vmatpush1.msra.mxu0 0.0
    %626 = vmatprep.subr.mxu0 0.0
    %627 = vmatpush1.msra.mxu0 0.0
    %628 = vmatprep.subr.mxu0 0.0
    %629 = vmatpush1.msra.mxu0 0.0
    %630 = vmatprep.subr.mxu0 0.0
    %631 = vmatpush1.msra.mxu0 0.0
    %632 = vmatprep.subr.mxu0 0.0
    %633 = vmatpush1.msra.mxu0 0.0
    %634 = vmatprep.mubr.f32.mxu0 0.0
    %635 = vmatmul.mubr.f32.gmra.mrb[0].mxu0 %v559
    %v636 = vpop.f32.mrb[0].mxu0
    %v637 = vadd.f32 %v541, %v636
    %v638 = vpop.f32.mrb[0].mxu0
    %639 = vmatprep.mubr.f32.mxu0 0.0
    %640 = vmatmul.mubr.f32.gmra.mrb[0].mxu0 %v562
    %v641 = vpop.f32.mrb[0].mxu0
    %v642 = vadd.f32 %v546, %v641
    %v643 = vpop.f32.mrb[0].mxu0
    %644 = vmatprep.mubr.f32.mxu0 0.0
    %645 = vmatmul.mubr.f32.gmra.mrb[0].mxu0 %v565
    %v646 = vpop.f32.mrb[0].mxu0
    %v647 = vadd.f32 %v551, %v646
    %v648 = vpop.f32.mrb[0].mxu0
    %649 = vmatprep.mubr.f32.mxu0 0.0
    %650 = vmatmul.mubr.f32.gmra.mrb[0].mxu0 %v568
    %v651 = vpop.f32.mrb[0].mxu0
    %v652 = vadd.f32 %v556, %v651
    %v653 = vpop.f32.mrb[0].mxu0
    %654 = vdwg.mxu0
    %655 = vst [vmem:[#allocation2] sm:$0xff] %v637
    %656 = vst [vmem:[#allocation2 + $0x8] sm:$0xff] %v642
    %657 = vst [vmem:[#allocation2 + $0x10] sm:$0xff] %v647
    %658 = vst [vmem:[#allocation2 + $0x18] sm:$0xff] %v652
    // Predicated region
    $region46: #{tpu_custom_call.1} parent=1 // pred_check
      _
    $region47: #{tpu_custom_call.1} parent=1 // pred_check_branch
      %660 = sbr.rel (0) target = $region49
    $region48: #{tpu_custom_call.1} parent=1 // pred_region
      %s662 = ssub.s32 512, 512
      %663 = vsyncadd [#allocation3], %s662
      %s664 = sshll.u32 [#allocation2], 4
      %s665 = int_to_ptr.vmem [resolvable:$true] %s664
      %670 = dma.vmem_to_hbm [thread:$0]  %s665, 512, %s11, [#allocation3], 128, 128, 8
    $region49: #{tpu_custom_call.1} parent=1 // pred_fallthru
      _
    // Predicated region
    $region50: #{tpu_custom_call.1} parent=1 // pred_check
      _
    $region51: #{tpu_custom_call.1} parent=1 // pred_check_branch
      %672 = sbr.rel (0) target = $region53
    $region52: #{tpu_custom_call.1} parent=1 // pred_region
      %673 = dma.done [#allocation3], 512
    $region53: #{tpu_custom_call.1} parent=1 // pred_fallthru
      _
    %674 = vsyncpa [#allocation3], 1

</llo_original>
